<compile_context>
chip_gen: v7x
topology: tpu7x:2x2x1
jax: 0.10.0
libtpu: 0.0.40
codegen_flags: <defaults>
</compile_context>

<pallas_src>
import functools

import jax
import jax.numpy as jnp
import numpy as np
from jax.experimental import pallas as pl
from jax.experimental.pallas import tpu as pltpu


_VMEM_LIMIT_BYTES = 48 * 1024 * 1024   # safe on v7x (64 MiB/TC); raises the
                                        # v6e/v5e scoped defaults (32/16 MiB).
_VMEM_STEP_BUDGET = 28 * 1024 * 1024    # per-grid-step working-set target used
                                        # to size the channel block (keeps the
                                        # same config VMEM-safe on v7x).


def _build_pool_plan(pool_sizes):
    """SPPF composition plan: list of (source_part_index, window_to_apply).

    For stride-1 / -inf padded max pooling, pool_a(pool_b(x)) == pool_{a+b-1}(x),
    so an increasing pool_size list (e.g. (5, 9, 13)) only needs small windows
    applied to the previous pooled result (24 shifted maxes instead of 48).
    """
    plan = []
    prev_size, prev_idx = 1, 0                 # part 0 is x itself
    for s in pool_sizes:
        assert s % 2 == 1, "SPP needs odd pool sizes (keeps spatial dims)"
        if s >= prev_size:
            plan.append((prev_idx, s - prev_size + 1))
        else:                                  # non-monotone: pool from x again
            plan.append((0, s))
        prev_idx = len(plan)                   # parts[k] (k>=1) = plan[k-1]
        prev_size = s
    return tuple(plan)


def _mask_specs(pool_plan):
    """Canonical ordering of the (axis, distance, sign) boundary masks."""
    all_d = sorted({d for _, win in pool_plan for d in range(1, win // 2 + 1)})
    specs = []
    for d in all_d:
        for sgn in (1, -1):
            specs.append(("w", d, sgn))
            specs.append(("h", d, sgn))
    index = {s: i for i, s in enumerate(specs)}
    return tuple(specs), index


def _mask_builder_kernel(row_ref, col_ref, o_ref, *, specs, W, HW_pad):
    """One-shot kernel: valid-neighbour masks (1.0 valid / 0.0 invalid).

    Rolls the int32 row/col index maps by exactly the shifts the main kernel
    applies to the data, so the masks are correct for whichever rotation
    direction pltpu.roll implements, and they absorb the row/col boundaries,
    the flat wrap-around and the HW -> HW_pad padding lanes (sentinel rows).
    """
    row = row_ref[...]                         # (1, HW_pad) int32
    col = col_ref[...]
    for i, (axis, d, sgn) in enumerate(specs):
        if axis == "w":                        # width-direction shift by +-d
            k = (sgn * d) % HW_pad
            ok = pltpu.roll(row, k, 1) == row
        else:                                  # height-direction shift by +-d rows
            k = (sgn * d * W) % HW_pad
            ok = ((pltpu.roll(col, k, 1) == col)
                  & (jnp.abs(pltpu.roll(row, k, 1) - row) == d))
        o_ref[i:i + 1, :] = jnp.where(ok, 1.0, 0.0).astype(o_ref.dtype)


@functools.lru_cache(maxsize=None)
def _build_valid_masks(H, W, HW_pad, specs):
    """Grid-invariant masks, built once per (H, W, pool_plan) and cached."""
    HW = H * W
    sentinel = -(H + W + 8)                    # never equals a valid row/col and
                                               # |sentinel - row| > any distance d
    idx = np.arange(HW_pad)
    row = np.where(idx < HW, idx // W, sentinel).astype(np.int32).reshape(1, HW_pad)
    col = np.where(idx < HW, idx % W, sentinel).astype(np.int32).reshape(1, HW_pad)
    return pl.pallas_call(
        functools.partial(_mask_builder_kernel, specs=specs, W=W, HW_pad=HW_pad),
        out_shape=jax.ShapeDtypeStruct((len(specs), HW_pad), jnp.float32),
    )(jnp.asarray(row), jnp.asarray(col))


def _pick_channel_block(C, HW_pad, cout, num_parts):
    """Largest channel block (divisor of C, multiple of 8) fitting the budget.

    Max pooling is per-channel, so channel tiling needs no halos."""
    if C <= 8 or C % 8 != 0:
        return C                               # (8,128) rule: take the full axis
    f32 = 4

    def per_step_bytes(cb):
        return (2 * cb * HW_pad * f32          # x block, double buffered
                + 3 * cb * HW_pad * f32        # live part + pooled + roll temp
                + 2 * num_parts * cout * cb * f32   # weight block, double buffered
                + 4 * cout * HW_pad * f32)     # f32 accumulator + z + out block

    divisors = [d for d in range(8, C + 1, 8) if C % d == 0]
    fitting = [d for d in divisors if per_step_bytes(d) <= _VMEM_STEP_BUDGET]
    return max(fitting) if fitting else min(divisors)


def _spp_kernel(x_ref, w_ref, shift_ref, mask_ref, o_ref, acc_ref, *,
                pool_plan, mask_index, W, HW_pad, n_cblocks):
    """Fused SPP for one (batch, channel-block) grid step; data is (CB, HW_pad)."""
    c = pl.program_id(1)

    @pl.when(c == 0)
    def _init():
        acc_ref[...] = jnp.zeros_like(acc_ref)

    x = x_ref[...]                             # (CB, HW_pad)

    # Hoisted boolean masks. The mask tensor has a constant block index so
    # Pallas fetches it once; this is just n_masks cheap VPU compares per step.
    pen = mask_ref[...]                        # (n_masks, HW_pad) f32 {1,0}
    valid = {key: pen[i:i + 1, :] > 0.5 for key, i in mask_index.items()}

    neg = float("-inf")

    def pool(v, size):
        """Stride-1 'same' (-inf padded) max pool, window size x size."""
        if size == 1:
            return v
        p = size // 2
        acc = v                                            # width direction
        for d in range(1, p + 1):
            for sgn in (1, -1):
                k = (sgn * d) % HW_pad
                acc = jnp.maximum(
                    acc, jnp.where(valid[("w", d, sgn)], pltpu.roll(v, k, 1), neg))
        out = acc                                          # height direction
        for d in range(1, p + 1):
            for sgn in (1, -1):
                k = (sgn * d * W) % HW_pad
                out = jnp.maximum(
                    out, jnp.where(valid[("h", d, sgn)], pltpu.roll(acc, k, 1), neg))
        return out

    # Interleaved 1x1-conv accumulation: each part's MXU dot issues as soon as
    # the part is produced, so only ~2 parts stay live (instead of 1+len(pool))
    # and the MXU pushes overlap the XLU rolls of the next part.
    z = jnp.dot(w_ref[0], x, preferred_element_type=jnp.float32)
    prev_idx, prev = 0, x
    for part_idx, (src, win) in enumerate(pool_plan, start=1):
        source = prev if src == prev_idx else x
        pooled = pool(source, win)
        z = z + jnp.dot(w_ref[part_idx], pooled, preferred_element_type=jnp.float32)
        prev_idx, prev = part_idx, pooled

    acc_ref[...] += z                          # running f32 accumulation over C blocks

    @pl.when(c == n_cblocks - 1)
    def _finalize():
        zf = acc_ref[...] + shift_ref[...]     # (cout, HW_pad) + (cout, 1)
        # Swish via EUP exp + reciprocal (flip approx=True if accuracy allows).
        sig = pl.reciprocal(1.0 + jnp.exp(-zf), approx=False)
        o_ref[...] = (zf * sig).astype(o_ref.dtype)


def spp_forward(x_nchw, conv_w, bn_scale, bn_shift, pool_sizes):
    """SPP forward. x: NCHW. conv_w: (ch_in, ch_out). Returns NCHW."""
    N, C, H, W = x_nchw.shape
    cin, cout = conv_w.shape
    num_parts = 1 + len(pool_sizes)
    assert cin == num_parts * C
    HW = H * W
    HW_pad = ((HW + 127) // 128) * 128         # lane-dense rolls/stores
    pool_plan = _build_pool_plan(pool_sizes)
    for _, win in pool_plan:
        # Also guarantees the flat wrap-around can never alias a valid
        # neighbour in the masks.
        # TODO(synk): PyTorch MaxPool2d accepts maps smaller than the window;
        #             supporting that needs per-stage window clamping here.
        assert min(H, W) >= win, "pool window must fit in the feature map"

    mask_specs, mask_index = _mask_specs(pool_plan)
    masks = _build_valid_masks(H, W, HW_pad, mask_specs)   # cached, grid-invariant

    CB = _pick_channel_block(C, HW_pad, cout, num_parts)
    n_cblocks = C // CB

    # Fold BN scale into the conv weight; lay it out as
    # (n_cblocks, num_parts, cout, CB) so the channel-block grid axis indexes a
    # leading dim and the trailing (cout, CB) dims stay full/(8,128)-legal.
    w_fold = conv_w.astype(jnp.float32) * bn_scale.astype(jnp.float32)[None, :]
    w_pc = jnp.transpose(w_fold.reshape(num_parts, C, cout), (0, 2, 1))   # (P,cout,C)
    w_blk = jnp.transpose(w_pc.reshape(num_parts, cout, n_cblocks, CB), (2, 0, 1, 3))
    shift2 = bn_shift.reshape(cout, 1).astype(jnp.float32)

    x_flat = x_nchw.reshape(N, C, HW)          # free reshape, stays NCHW in HBM
    if HW_pad != HW:
        x_flat = jnp.pad(x_flat, ((0, 0), (0, 0), (0, HW_pad - HW)))

    kernel = functools.partial(_spp_kernel, pool_plan=pool_plan,
                               mask_index=mask_index, W=W, HW_pad=HW_pad,
                               n_cblocks=n_cblocks)
    out_flat = pl.pallas_call(
        kernel,
        out_shape=jax.ShapeDtypeStruct((N, cout, HW_pad), x_nchw.dtype),
        grid_spec=pltpu.PrefetchScalarGridSpec(
            num_scalar_prefetch=0,
            grid=(N, n_cblocks),               # reduction (channel) axis last
            in_specs=[
                pl.BlockSpec((None, CB, HW_pad), lambda n, c: (n, c, 0)),            # x
                pl.BlockSpec((None, num_parts, cout, CB), lambda n, c: (c, 0, 0, 0)),  # w
                pl.BlockSpec((cout, 1), lambda n, c: (0, 0)),                        # shift
                pl.BlockSpec((len(mask_specs), HW_pad), lambda n, c: (0, 0)),        # masks
            ],
            out_specs=pl.BlockSpec((None, cout, HW_pad), lambda n, c: (n, 0, 0)),
            scratch_shapes=[pltpu.VMEM((cout, HW_pad), jnp.float32)],                # conv acc
        ),
        compiler_params=pltpu.CompilerParams(
            dimension_semantics=("parallel", "arbitrary"),
            vmem_limit_bytes=_VMEM_LIMIT_BYTES),
    )(x_flat, w_blk, shift2, masks)

    out = out_flat[..., :HW] if HW_pad != HW else out_flat
    return out.reshape(N, cout, H, W)          # free reshape: already NCHW


# ---------------------------------------------------------------------------
# Pure-JAX reference (for correctness check)
# ---------------------------------------------------------------------------
def spp_reference(x_nchw, conv_w, bn_scale, bn_shift, pool_sizes):
    outs = [x_nchw]
    for s in pool_sizes:
        p = s // 2
        pooled = jax.lax.reduce_window(
            x_nchw, -jnp.inf, jax.lax.max,
            window_dimensions=(1, 1, s, s),
            window_strides=(1, 1, 1, 1),
            padding=((0, 0), (0, 0), (p, p), (p, p)))
        outs.append(pooled)
    y = jnp.concatenate(outs, axis=1)                      # NCHW channel concat
    z = jnp.einsum('nchw,co->nohw', y, conv_w)             # 1x1 conv, no bias
    z = z * bn_scale[None, :, None, None] + bn_shift[None, :, None, None]
    return z * jax.nn.sigmoid(z)                           # Swish


def _run_case(key, N, C, H, W, ch_out, pool_sizes):
    ch_in = C * (1 + len(pool_sizes))
    kx, kw, kg, kb, km, kv = jax.random.split(key, 6)
    x = jax.random.normal(kx, (N, C, H, W), dtype=jnp.float32)

    # Deterministic parameter init (Conv2d weight, BatchNorm2d in eval mode).
    conv_w = (jax.random.normal(kw, (ch_in, ch_out), dtype=jnp.float32)
              * (1.0 / jnp.sqrt(ch_in)))
    gamma = 1.0 + 0.1 * jax.random.normal(kg, (ch_out,), dtype=jnp.float32)
    beta = 0.1 * jax.random.normal(kb, (ch_out,), dtype=jnp.float32)
    running_mean = 0.1 * jax.random.normal(km, (ch_out,), dtype=jnp.float32)
    running_var = 1.0 + 0.1 * jax.random.uniform(kv, (ch_out,), dtype=jnp.float32)
    eps = 1e-5
    bn_scale = gamma / jnp.sqrt(running_var + eps)
    bn_shift = beta - running_mean * bn_scale

    out = jax.block_until_ready(
        spp_forward(x, conv_w, bn_scale, bn_shift, pool_sizes))
    ref = spp_reference(x, conv_w, bn_scale, bn_shift, pool_sizes)
    assert out.shape == (N, ch_out, H, W)
    assert jnp.allclose(out, ref, atol=1e-4, rtol=1e-4), (
        f"mismatch vs reference for input shape {(N, C, H, W)}")


if __name__ == "__main__":
    key = jax.random.PRNGKey(0)
    k1, k2 = jax.random.split(key)
    # SPP: batch=2, x channels=4, 16x16 map, pool sizes (5, 9, 13),
    # concat ch_in = 4*(1+3) = 16 -> 1x1 conv -> BN(eval) -> Swish, ch_out = 8.
    _run_case(k1, N=2, C=4, H=16, W=16, ch_out=8, pool_sizes=(5, 9, 13))
    # Non-128-multiple feature map (13x13: HW=169 padded to 256) to exercise
    # the lane-padding + precomputed-mask path.
    _run_case(k2, N=1, C=4, H=13, W=13, ch_out=8, pool_sizes=(5, 9, 13))
    print("KERNEL_OK")
</pallas_src>

<mosaic_0001>
module attributes {stable_mosaic.version = 11 : i64} {
  func.func @_mask_builder_kernel(%arg0: memref<1x256xi32, #tpu.memory_space<vmem>>, %arg1: memref<1x256xi32, #tpu.memory_space<vmem>>, %arg2: memref<8x256xf32, #tpu.memory_space<vmem>>) attributes {dimension_semantics = [], scalar_prefetch = 0 : i64, scratch_operands = 0 : i64, tpu.core_type = #tpu.core_type<tc>} {
    %c0 = arith.constant 0 : index
    %c0_0 = arith.constant 0 : index
    %0 = vector.load %arg0[%c0, %c0_0] : memref<1x256xi32, #tpu.memory_space<vmem>>, vector<1x256xi32>
    %c0_1 = arith.constant 0 : index
    %c0_2 = arith.constant 0 : index
    %1 = vector.load %arg1[%c0_1, %c0_2] : memref<1x256xi32, #tpu.memory_space<vmem>>, vector<1x256xi32>
    %c1_i32 = arith.constant 1 : i32
    %2 = tpu.dynamic_rotate %0 by %c1_i32 dim 1 : vector<1x256xi32>, i32 -> vector<1x256xi32>
    %3 = arith.cmpi eq, %2, %0 : vector<1x256xi32>
    %cst = arith.constant 1.000000e+00 : f32
    %cst_3 = arith.constant 0.000000e+00 : f32
    %4 = vector.broadcast %cst : f32 to vector<1x256xf32>
    %5 = vector.broadcast %cst_3 : f32 to vector<1x256xf32>
    %6 = arith.select %3, %4, %5 : vector<1x256xi1>, vector<1x256xf32>
    %c0_4 = arith.constant 0 : index
    %c0_5 = arith.constant 0 : index
    %7 = vector.load %arg2[%c0_4, %c0_5] : memref<8x256xf32, #tpu.memory_space<vmem>>, vector<1x256xf32>
    tpu.vector_store %arg2[%c0_4, %c0_5], %6 {strides = array<i32>} : memref<8x256xf32, #tpu.memory_space<vmem>>, vector<1x256xf32>,
    %c16_i32 = arith.constant 16 : i32
    %8 = tpu.dynamic_rotate %1 by %c16_i32 dim 1 : vector<1x256xi32>, i32 -> vector<1x256xi32>
    %9 = arith.cmpi eq, %8, %1 : vector<1x256xi32>
    %c16_i32_6 = arith.constant 16 : i32
    %10 = tpu.dynamic_rotate %0 by %c16_i32_6 dim 1 : vector<1x256xi32>, i32 -> vector<1x256xi32>
    %11 = arith.subi %10, %0 : vector<1x256xi32>
    %12 = math.absi %11 : vector<1x256xi32>
    %c1_i32_7 = arith.constant 1 : i32
    %13 = vector.broadcast %c1_i32_7 : i32 to vector<1x256xi32>
    %14 = arith.cmpi eq, %12, %13 : vector<1x256xi32>
    %15 = arith.andi %9, %14 : vector<1x256xi1>
    %cst_8 = arith.constant 1.000000e+00 : f32
    %cst_9 = arith.constant 0.000000e+00 : f32
    %16 = vector.broadcast %cst_8 : f32 to vector<1x256xf32>
    %17 = vector.broadcast %cst_9 : f32 to vector<1x256xf32>
    %18 = arith.select %15, %16, %17 : vector<1x256xi1>, vector<1x256xf32>
    %c1 = arith.constant 1 : index
    %c0_10 = arith.constant 0 : index
    %19 = vector.load %arg2[%c1, %c0_10] : memref<8x256xf32, #tpu.memory_space<vmem>>, vector<1x256xf32>
    tpu.vector_store %arg2[%c1, %c0_10], %18 {strides = array<i32>} : memref<8x256xf32, #tpu.memory_space<vmem>>, vector<1x256xf32>,
    %c255_i32 = arith.constant 255 : i32
    %20 = tpu.dynamic_rotate %0 by %c255_i32 dim 1 : vector<1x256xi32>, i32 -> vector<1x256xi32>
    %21 = arith.cmpi eq, %20, %0 : vector<1x256xi32>
    %cst_11 = arith.constant 1.000000e+00 : f32
    %cst_12 = arith.constant 0.000000e+00 : f32
    %22 = vector.broadcast %cst_11 : f32 to vector<1x256xf32>
    %23 = vector.broadcast %cst_12 : f32 to vector<1x256xf32>
    %24 = arith.select %21, %22, %23 : vector<1x256xi1>, vector<1x256xf32>
    %c2 = arith.constant 2 : index
    %c0_13 = arith.constant 0 : index
    %25 = vector.load %arg2[%c2, %c0_13] : memref<8x256xf32, #tpu.memory_space<vmem>>, vector<1x256xf32>
    tpu.vector_store %arg2[%c2, %c0_13], %24 {strides = array<i32>} : memref<8x256xf32, #tpu.memory_space<vmem>>, vector<1x256xf32>,
    %c240_i32 = arith.constant 240 : i32
    %26 = tpu.dynamic_rotate %1 by %c240_i32 dim 1 : vector<1x256xi32>, i32 -> vector<1x256xi32>
    %27 = arith.cmpi eq, %26, %1 : vector<1x256xi32>
    %c240_i32_14 = arith.constant 240 : i32
    %28 = tpu.dynamic_rotate %0 by %c240_i32_14 dim 1 : vector<1x256xi32>, i32 -> vector<1x256xi32>
    %29 = arith.subi %28, %0 : vector<1x256xi32>
    %30 = math.absi %29 : vector<1x256xi32>
    %c1_i32_15 = arith.constant 1 : i32
    %31 = vector.broadcast %c1_i32_15 : i32 to vector<1x256xi32>
    %32 = arith.cmpi eq, %30, %31 : vector<1x256xi32>
    %33 = arith.andi %27, %32 : vector<1x256xi1>
    %cst_16 = arith.constant 1.000000e+00 : f32
    %cst_17 = arith.constant 0.000000e+00 : f32
    %34 = vector.broadcast %cst_16 : f32 to vector<1x256xf32>
    %35 = vector.broadcast %cst_17 : f32 to vector<1x256xf32>
    %36 = arith.select %33, %34, %35 : vector<1x256xi1>, vector<1x256xf32>
    %c3 = arith.constant 3 : index
    %c0_18 = arith.constant 0 : index
    %37 = vector.load %arg2[%c3, %c0_18] : memref<8x256xf32, #tpu.memory_space<vmem>>, vector<1x256xf32>
    tpu.vector_store %arg2[%c3, %c0_18], %36 {strides = array<i32>} : memref<8x256xf32, #tpu.memory_space<vmem>>, vector<1x256xf32>,
    %c2_i32 = arith.constant 2 : i32
    %38 = tpu.dynamic_rotate %0 by %c2_i32 dim 1 : vector<1x256xi32>, i32 -> vector<1x256xi32>
    %39 = arith.cmpi eq, %38, %0 : vector<1x256xi32>
    %cst_19 = arith.constant 1.000000e+00 : f32
    %cst_20 = arith.constant 0.000000e+00 : f32
    %40 = vector.broadcast %cst_19 : f32 to vector<1x256xf32>
    %41 = vector.broadcast %cst_20 : f32 to vector<1x256xf32>
    %42 = arith.select %39, %40, %41 : vector<1x256xi1>, vector<1x256xf32>
    %c4 = arith.constant 4 : index
    %c0_21 = arith.constant 0 : index
    %43 = vector.load %arg2[%c4, %c0_21] : memref<8x256xf32, #tpu.memory_space<vmem>>, vector<1x256xf32>
    tpu.vector_store %arg2[%c4, %c0_21], %42 {strides = array<i32>} : memref<8x256xf32, #tpu.memory_space<vmem>>, vector<1x256xf32>,
    %c32_i32 = arith.constant 32 : i32
    %44 = tpu.dynamic_rotate %1 by %c32_i32 dim 1 : vector<1x256xi32>, i32 -> vector<1x256xi32>
    %45 = arith.cmpi eq, %44, %1 : vector<1x256xi32>
    %c32_i32_22 = arith.constant 32 : i32
    %46 = tpu.dynamic_rotate %0 by %c32_i32_22 dim 1 : vector<1x256xi32>, i32 -> vector<1x256xi32>
    %47 = arith.subi %46, %0 : vector<1x256xi32>
    %48 = math.absi %47 : vector<1x256xi32>
    %c2_i32_23 = arith.constant 2 : i32
    %49 = vector.broadcast %c2_i32_23 : i32 to vector<1x256xi32>
    %50 = arith.cmpi eq, %48, %49 : vector<1x256xi32>
    %51 = arith.andi %45, %50 : vector<1x256xi1>
    %cst_24 = arith.constant 1.000000e+00 : f32
    %cst_25 = arith.constant 0.000000e+00 : f32
    %52 = vector.broadcast %cst_24 : f32 to vector<1x256xf32>
    %53 = vector.broadcast %cst_25 : f32 to vector<1x256xf32>
    %54 = arith.select %51, %52, %53 : vector<1x256xi1>, vector<1x256xf32>
    %c5 = arith.constant 5 : index
    %c0_26 = arith.constant 0 : index
    %55 = vector.load %arg2[%c5, %c0_26] : memref<8x256xf32, #tpu.memory_space<vmem>>, vector<1x256xf32>
    tpu.vector_store %arg2[%c5, %c0_26], %54 {strides = array<i32>} : memref<8x256xf32, #tpu.memory_space<vmem>>, vector<1x256xf32>,
    %c254_i32 = arith.constant 254 : i32
    %56 = tpu.dynamic_rotate %0 by %c254_i32 dim 1 : vector<1x256xi32>, i32 -> vector<1x256xi32>
    %57 = arith.cmpi eq, %56, %0 : vector<1x256xi32>
    %cst_27 = arith.constant 1.000000e+00 : f32
    %cst_28 = arith.constant 0.000000e+00 : f32
    %58 = vector.broadcast %cst_27 : f32 to vector<1x256xf32>
    %59 = vector.broadcast %cst_28 : f32 to vector<1x256xf32>
    %60 = arith.select %57, %58, %59 : vector<1x256xi1>, vector<1x256xf32>
    %c6 = arith.constant 6 : index
    %c0_29 = arith.constant 0 : index
    %61 = vector.load %arg2[%c6, %c0_29] : memref<8x256xf32, #tpu.memory_space<vmem>>, vector<1x256xf32>
    tpu.vector_store %arg2[%c6, %c0_29], %60 {strides = array<i32>} : memref<8x256xf32, #tpu.memory_space<vmem>>, vector<1x256xf32>,
    %c224_i32 = arith.constant 224 : i32
    %62 = tpu.dynamic_rotate %1 by %c224_i32 dim 1 : vector<1x256xi32>, i32 -> vector<1x256xi32>
    %63 = arith.cmpi eq, %62, %1 : vector<1x256xi32>
    %c224_i32_30 = arith.constant 224 : i32
    %64 = tpu.dynamic_rotate %0 by %c224_i32_30 dim 1 : vector<1x256xi32>, i32 -> vector<1x256xi32>
    %65 = arith.subi %64, %0 : vector<1x256xi32>
    %66 = math.absi %65 : vector<1x256xi32>
    %c2_i32_31 = arith.constant 2 : i32
    %67 = vector.broadcast %c2_i32_31 : i32 to vector<1x256xi32>
    %68 = arith.cmpi eq, %66, %67 : vector<1x256xi32>
    %69 = arith.andi %63, %68 : vector<1x256xi1>
    %cst_32 = arith.constant 1.000000e+00 : f32
    %cst_33 = arith.constant 0.000000e+00 : f32
    %70 = vector.broadcast %cst_32 : f32 to vector<1x256xf32>
    %71 = vector.broadcast %cst_33 : f32 to vector<1x256xf32>
    %72 = arith.select %69, %70, %71 : vector<1x256xi1>, vector<1x256xf32>
    %c7 = arith.constant 7 : index
    %c0_34 = arith.constant 0 : index
    %73 = vector.load %arg2[%c7, %c0_34] : memref<8x256xf32, #tpu.memory_space<vmem>>, vector<1x256xf32>
    tpu.vector_store %arg2[%c7, %c0_34], %72 {strides = array<i32>} : memref<8x256xf32, #tpu.memory_space<vmem>>, vector<1x256xf32>,
    return
  }
}

</mosaic_0001>

<llo_original>
// kernel: tpu_custom_call.1
$region0: #{tpu_custom_call.1}
  #allocation0 [shape = 'u32[]', space=smem, size = 0x4, offset = 0x4, fixed_abs, tag = 'smem constant byte address 0x4 - core index']
  #allocation1 [shape = 'u32[144,128]{1,0:T(1,128)}', space=vmem, size = 0x12000, scoped, tag = 'internal scratch']
  %s0 = inlined_call_operand.hbm [shape: s32[1,256], index: 0, kind: input, shape index: {}]
  %s1 = inlined_call_operand.vmem [shape: s32[1,256], index: 1, kind: input, shape index: {}]
  %s2 = inlined_call_operand.hbm [shape: f32[8,256], index: 2, kind: output, shape index: {}]
  %s3 = sld [smem:[#allocation0]]
  $region22: #{tpu_custom_call.1} parent=0
    _
  %s5 = ssub.s32 1, %s3
  %s6 = scalar_select 0, %s5, %s3
  $region1: #{tpu_custom_call.1} parent=0
    #allocation2 [shape = 'u8[1024]{0}', space=vmem, size = 0x400, scoped, tag = 'input window, operand 0, single buffered']
    #allocation3 [shape = 's32[1]{0}', space=sflag, size = 0x4, scoped, tag = 'scoped memory for tpu_custom_call.1']
    #allocation4 [shape = 's32[1]{0}', space=sflag, size = 0x4, scoped, tag = 'scoped memory for tpu_custom_call.1']
    #allocation5 [shape = 'u8[8192]{0}', space=vmem, size = 0x2000, scoped, tag = 'output window, operand 0, single buffered']
    %7 = vsyncpa [#allocation3], 0
    %8 = vsyncpa [#allocation4], 0
    // Predicated region
    $region2: #{tpu_custom_call.1} parent=1 // pred_check
      _
    $region3: #{tpu_custom_call.1} parent=1 // pred_check_branch
      %10 = sbr.rel (0) target = $region5
    $region4: #{tpu_custom_call.1} parent=1 // pred_region
      %s12 = ssub.s32 32, 32
      %13 = vsyncadd [#allocation3], %s12
      %s15 = sshll.u32 [#allocation2], 4
      %s16 = int_to_ptr.vmem [resolvable:$true] %s15
      %18 = dma.hbm_to_vmem [thread:$0]  %s0, 32, %s16, [#allocation3]
    $region5: #{tpu_custom_call.1} parent=1 // pred_fallthru
      _
    // Predicated region
    $region6: #{tpu_custom_call.1} parent=1 // pred_check
      _
    $region7: #{tpu_custom_call.1} parent=1 // pred_check_branch
      %20 = sbr.rel (0) target = $region9
    $region8: #{tpu_custom_call.1} parent=1 // pred_region
      _
    $region9: #{tpu_custom_call.1} parent=1 // pred_fallthru
      _
    // Predicated region
    $region10: #{tpu_custom_call.1} parent=1 // pred_check
      _
    $region11: #{tpu_custom_call.1} parent=1 // pred_check_branch
      %22 = sbr.rel (0) target = $region13
    $region12: #{tpu_custom_call.1} parent=1 // pred_region
      %23 = dma.done [#allocation3], 32
    $region13: #{tpu_custom_call.1} parent=1 // pred_fallthru
      _
    %v24 = vld [vmem:[#allocation2] sm:$0x3]
    %v25 = vld [vmem:[%s1] sm:$0x3]
    %v26 = vlaneseq
    %v27 = vshrl.u32 %v26, 7
    %v28 = vsub.s32 0, %v27
    %v29 = vrot.slane %v24, %v28
    %v30 = vlaneseq
    %v31 = vshrl.u32 %v30, 7
    %v32 = vsub.s32 1, %v31
    %v33 = vrot.slane %v24, %v32
    %34 = vrot.lane.b32.xlu0 %v29, 1
    %v35 = vpop.permute.xlu0 %34
    %36 = vrot.lane.b32.xlu0 %v33, 1
    %v37 = vpop.permute.xlu0 %36
    %v38 = vlaneseq
    %v39 = vand.u32 %v38, 127
    %vm40 = vcmp.lt.s32.totalorder %v39, 1
    %v41 = vsel %vm40, %v35, %v37
    %v42 = vsel %vm40, %v37, %v35
    %vm43 = vcmp.eq.s32.totalorder %v42, %v29
    %vm44 = vcmp.eq.s32.totalorder %v41, %v33
    %v45 = vsel %vm43, 1.0, 0.0
    %v46 = vsel %vm44, 1.0, 0.0
    %v49 = vcombine.low %v45, %v46
    %v51 = vunpack.c.l.s4 1966171168
    %v52 = vunpack.c.0.s8 %v51
    %v53 = vlaneseq
    %v54 = vshrl.u32 %v53, 7
    %v55 = vsub.s32 %v52, %v54
    %v56 = vrot.slane %v49, %v55
    %v58 = vunpack.c.l.s4 1966171168
    %v59 = vunpack.c.0.s8 %v58
    %v60 = vlaneseq
    %v61 = vshrl.u32 %v60, 7
    %v62 = vsub.s32 %v59, %v61
    %v63 = vrot.slane %v56, %v62
    %v65 = vlaneseq
    %vm66 = vcmp.ge.s32.totalorder %v65, 0
    %vm67 = vcmp.lt.s32.totalorder %v65, 256
    %vm68 = vmand %vm66, %vm67
    %69 = vst.msk [vmem:[#allocation5] ss:$8 sm:$0x3] %vm68, %v63
    %70 = vst.msk [vmem:[#allocation5] ss:$8 sm:$0x0] %vm68, %v63
    %v71 = vlaneseq
    %v72 = vshrl.u32 %v71, 7
    %v73 = vsub.s32 0, %v72
    %v74 = vrot.slane %v25, %v73
    %v75 = vlaneseq
    %v76 = vshrl.u32 %v75, 7
    %v77 = vsub.s32 1, %v76
    %v78 = vrot.slane %v25, %v77
    %79 = vrot.lane.b32.xlu0 %v74, 16
    %v80 = vpop.permute.xlu0 %79
    %81 = vrot.lane.b32.xlu0 %v78, 16
    %v82 = vpop.permute.xlu0 %81
    %vm83 = vcmp.lt.s32.totalorder %v39, 16
    %v84 = vsel %vm83, %v80, %v82
    %v85 = vsel %vm83, %v82, %v80
    %vm86 = vcmp.eq.s32.totalorder %v85, %v74
    %vm87 = vcmp.eq.s32.totalorder %v84, %v78
    %88 = vrot.lane.b32.xlu0 %v29, 16
    %v89 = vpop.permute.xlu0 %88
    %90 = vrot.lane.b32.xlu0 %v33, 16
    %v91 = vpop.permute.xlu0 %90
    %v92 = vsel %vm83, %v89, %v91
    %v93 = vsel %vm83, %v91, %v89
    %v94 = vsub.s32 %v93, %v29
    %v95 = vsub.s32 %v92, %v33
    %vm96 = vcmp.lt.s32.totalorder %v94, 0
    %v97 = vsub.s32 0, %v94
    %v98 = vsel %vm96, %v97, %v94
    %vm99 = vcmp.lt.s32.totalorder %v95, 0
    %v100 = vsub.s32 0, %v95
    %v101 = vsel %vm99, %v100, %v95
    %vm102 = vcmp.eq.s32.totalorder %v98, 1
    %vm103 = vcmp.eq.s32.totalorder %v101, 1
    %vm104 = vmand %vm86, %vm102
    %vm105 = vmand %vm87, %vm103
    %v106 = vsel %vm104, 1.0, 0.0
    %v107 = vsel %vm105, 1.0, 0.0
    %v110 = vcombine.low %v106, %v107
    %v112 = vunpack.c.l.s4 1966171168
    %v113 = vunpack.c.0.s8 %v112
    %v114 = vlaneseq
    %v115 = vshrl.u32 %v114, 7
    %v116 = vsub.s32 %v113, %v115
    %v117 = vrot.slane %v110, %v116
    %v119 = vunpack.c.l.s4 1966171168
    %v120 = vunpack.c.0.s8 %v119
    %v121 = vlaneseq
    %v122 = vshrl.u32 %v121, 7
    %v123 = vsub.s32 %v120, %v122
    %v124 = vrot.slane %v117, %v123
    %s126 = scalar_lea.vmem [#allocation5], 1
    %127 = vst.msk [vmem:[%s126] ss:$8 sm:$0x3] %vm68, %v124
    %128 = vst.msk [vmem:[%s126] ss:$8 sm:$0x0] %vm68, %v124
    %129 = vrot.lane.b32.xlu0 %v29, 127
    %v130 = vpop.permute.xlu0 %129
    %131 = vrot.lane.b32.xlu0 %v33, 127
    %v132 = vpop.permute.xlu0 %131
    %vm133 = vcmp.lt.s32.totalorder %v39, 127
    %v134 = vsel %vm133, %v130, %v132
    %v135 = vsel %vm133, %v132, %v130
    %vm136 = vcmp.eq.s32.totalorder %v134, %v29
    %vm137 = vcmp.eq.s32.totalorder %v135, %v33
    %v138 = vsel %vm136, 1.0, 0.0
    %v139 = vsel %vm137, 1.0, 0.0
    %v142 = vcombine.low %v138, %v139
    %v144 = vunpack.c.l.s4 1966171168
    %v145 = vunpack.c.0.s8 %v144
    %v146 = vlaneseq
    %v147 = vshrl.u32 %v146, 7
    %v148 = vsub.s32 %v145, %v147
    %v149 = vrot.slane %v142, %v148
    %v151 = vunpack.c.l.s4 1966171168
    %v152 = vunpack.c.0.s8 %v151
    %v153 = vlaneseq
    %v154 = vshrl.u32 %v153, 7
    %v155 = vsub.s32 %v152, %v154
    %v156 = vrot.slane %v149, %v155
    %s158 = scalar_lea.vmem [#allocation5], 2
    %159 = vst.msk [vmem:[%s158] ss:$8 sm:$0x3] %vm68, %v156
    %160 = vst.msk [vmem:[%s158] ss:$8 sm:$0x0] %vm68, %v156
    %161 = vrot.lane.b32.xlu0 %v74, 112
    %v162 = vpop.permute.xlu0 %161
    %163 = vrot.lane.b32.xlu0 %v78, 112
    %v164 = vpop.permute.xlu0 %163
    %vm165 = vcmp.lt.s32.totalorder %v39, 112
    %v166 = vsel %vm165, %v162, %v164
    %v167 = vsel %vm165, %v164, %v162
    %vm168 = vcmp.eq.s32.totalorder %v166, %v74
    %vm169 = vcmp.eq.s32.totalorder %v167, %v78
    %170 = vrot.lane.b32.xlu0 %v29, 112
    %v171 = vpop.permute.xlu0 %170
    %172 = vrot.lane.b32.xlu0 %v33, 112
    %v173 = vpop.permute.xlu0 %172
    %v174 = vsel %vm165, %v171, %v173
    %v175 = vsel %vm165, %v173, %v171
    %v176 = vsub.s32 %v174, %v29
    %v177 = vsub.s32 %v175, %v33
    %vm178 = vcmp.lt.s32.totalorder %v176, 0
    %v179 = vsub.s32 0, %v176
    %v180 = vsel %vm178, %v179, %v176
    %vm181 = vcmp.lt.s32.totalorder %v177, 0
    %v182 = vsub.s32 0, %v177
    %v183 = vsel %vm181, %v182, %v177
    %vm184 = vcmp.eq.s32.totalorder %v180, 1
    %vm185 = vcmp.eq.s32.totalorder %v183, 1
    %vm186 = vmand %vm168, %vm184
    %vm187 = vmand %vm169, %vm185
    %v188 = vsel %vm186, 1.0, 0.0
    %v189 = vsel %vm187, 1.0, 0.0
    %v192 = vcombine.low %v188, %v189
    %v194 = vunpack.c.l.s4 1966171168
    %v195 = vunpack.c.0.s8 %v194
    %v196 = vlaneseq
    %v197 = vshrl.u32 %v196, 7
    %v198 = vsub.s32 %v195, %v197
    %v199 = vrot.slane %v192, %v198
    %v201 = vunpack.c.l.s4 1966171168
    %v202 = vunpack.c.0.s8 %v201
    %v203 = vlaneseq
    %v204 = vshrl.u32 %v203, 7
    %v205 = vsub.s32 %v202, %v204
    %v206 = vrot.slane %v199, %v205
    %s208 = scalar_lea.vmem [#allocation5], 3
    %209 = vst.msk [vmem:[%s208] ss:$8 sm:$0x3] %vm68, %v206
    %210 = vst.msk [vmem:[%s208] ss:$8 sm:$0x0] %vm68, %v206
    %211 = vrot.lane.b32.xlu0 %v29, 2
    %v212 = vpop.permute.xlu0 %211
    %213 = vrot.lane.b32.xlu0 %v33, 2
    %v214 = vpop.permute.xlu0 %213
    %vm215 = vcmp.lt.s32.totalorder %v39, 2
    %v216 = vsel %vm215, %v212, %v214
    %v217 = vsel %vm215, %v214, %v212
    %vm218 = vcmp.eq.s32.totalorder %v217, %v29
    %vm219 = vcmp.eq.s32.totalorder %v216, %v33
    %v220 = vsel %vm218, 1.0, 0.0
    %v221 = vsel %vm219, 1.0, 0.0
    %v224 = vcombine.low %v220, %v221
    %v226 = vunpack.c.l.s4 1966171168
    %v227 = vunpack.c.0.s8 %v226
    %v228 = vlaneseq
    %v229 = vshrl.u32 %v228, 7
    %v230 = vsub.s32 %v227, %v229
    %v231 = vrot.slane %v224, %v230
    %v233 = vunpack.c.l.s4 1966171168
    %v234 = vunpack.c.0.s8 %v233
    %v235 = vlaneseq
    %v236 = vshrl.u32 %v235, 7
    %v237 = vsub.s32 %v234, %v236
    %v238 = vrot.slane %v231, %v237
    %s240 = scalar_lea.vmem [#allocation5], 4
    %241 = vst.msk [vmem:[%s240] ss:$8 sm:$0x3] %vm68, %v238
    %242 = vst.msk [vmem:[%s240] ss:$8 sm:$0x0] %vm68, %v238
    %243 = vrot.lane.b32.xlu0 %v74, 32
    %v244 = vpop.permute.xlu0 %243
    %245 = vrot.lane.b32.xlu0 %v78, 32
    %v246 = vpop.permute.xlu0 %245
    %vm247 = vcmp.lt.s32.totalorder %v39, 32
    %v248 = vsel %vm247, %v244, %v246
    %v249 = vsel %vm247, %v246, %v244
    %vm250 = vcmp.eq.s32.totalorder %v249, %v74
    %vm251 = vcmp.eq.s32.totalorder %v248, %v78
    %252 = vrot.lane.b32.xlu0 %v29, 32
    %v253 = vpop.permute.xlu0 %252
    %254 = vrot.lane.b32.xlu0 %v33, 32
    %v255 = vpop.permute.xlu0 %254
    %v256 = vsel %vm247, %v253, %v255
    %v257 = vsel %vm247, %v255, %v253
    %v258 = vsub.s32 %v257, %v29
    %v259 = vsub.s32 %v256, %v33
    %vm260 = vcmp.lt.s32.totalorder %v258, 0
    %v261 = vsub.s32 0, %v258
    %v262 = vsel %vm260, %v261, %v258
    %vm263 = vcmp.lt.s32.totalorder %v259, 0
    %v264 = vsub.s32 0, %v259
    %v265 = vsel %vm263, %v264, %v259
    %vm266 = vcmp.eq.s32.totalorder %v262, 2
    %vm267 = vcmp.eq.s32.totalorder %v265, 2
    %vm268 = vmand %vm250, %vm266
    %vm269 = vmand %vm251, %vm267
    %v270 = vsel %vm268, 1.0, 0.0
    %v271 = vsel %vm269, 1.0, 0.0
    %v274 = vcombine.low %v270, %v271
    %v276 = vunpack.c.l.s4 1966171168
    %v277 = vunpack.c.0.s8 %v276
    %v278 = vlaneseq
    %v279 = vshrl.u32 %v278, 7
    %v280 = vsub.s32 %v277, %v279
    %v281 = vrot.slane %v274, %v280
    %v283 = vunpack.c.l.s4 1966171168
    %v284 = vunpack.c.0.s8 %v283
    %v285 = vlaneseq
    %v286 = vshrl.u32 %v285, 7
    %v287 = vsub.s32 %v284, %v286
    %v288 = vrot.slane %v281, %v287
    %s290 = scalar_lea.vmem [#allocation5], 5
    %291 = vst.msk [vmem:[%s290] ss:$8 sm:$0x3] %vm68, %v288
    %292 = vst.msk [vmem:[%s290] ss:$8 sm:$0x0] %vm68, %v288
    %293 = vrot.lane.b32.xlu0 %v29, 126
    %v294 = vpop.permute.xlu0 %293
    %295 = vrot.lane.b32.xlu0 %v33, 126
    %v296 = vpop.permute.xlu0 %295
    %vm297 = vcmp.lt.s32.totalorder %v39, 126
    %v298 = vsel %vm297, %v294, %v296
    %v299 = vsel %vm297, %v296, %v294
    %vm300 = vcmp.eq.s32.totalorder %v298, %v29
    %vm301 = vcmp.eq.s32.totalorder %v299, %v33
    %v302 = vsel %vm300, 1.0, 0.0
    %v303 = vsel %vm301, 1.0, 0.0
    %v306 = vcombine.low %v302, %v303
    %v308 = vunpack.c.l.s4 1966171168
    %v309 = vunpack.c.0.s8 %v308
    %v310 = vlaneseq
    %v311 = vshrl.u32 %v310, 7
    %v312 = vsub.s32 %v309, %v311
    %v313 = vrot.slane %v306, %v312
    %v315 = vunpack.c.l.s4 1966171168
    %v316 = vunpack.c.0.s8 %v315
    %v317 = vlaneseq
    %v318 = vshrl.u32 %v317, 7
    %v319 = vsub.s32 %v316, %v318
    %v320 = vrot.slane %v313, %v319
    %s322 = scalar_lea.vmem [#allocation5], 6
    %323 = vst.msk [vmem:[%s322] ss:$8 sm:$0x3] %vm68, %v320
    %324 = vst.msk [vmem:[%s322] ss:$8 sm:$0x0] %vm68, %v320
    %325 = vrot.lane.b32.xlu0 %v74, 96
    %v326 = vpop.permute.xlu0 %325
    %327 = vrot.lane.b32.xlu0 %v78, 96
    %v328 = vpop.permute.xlu0 %327
    %vm329 = vcmp.lt.s32.totalorder %v39, 96
    %v330 = vsel %vm329, %v326, %v328
    %v331 = vsel %vm329, %v328, %v326
    %vm332 = vcmp.eq.s32.totalorder %v330, %v74
    %vm333 = vcmp.eq.s32.totalorder %v331, %v78
    %334 = vrot.lane.b32.xlu0 %v29, 96
    %v335 = vpop.permute.xlu0 %334
    %336 = vrot.lane.b32.xlu0 %v33, 96
    %v337 = vpop.permute.xlu0 %336
    %v338 = vsel %vm329, %v335, %v337
    %v339 = vsel %vm329, %v337, %v335
    %v340 = vsub.s32 %v338, %v29
    %v341 = vsub.s32 %v339, %v33
    %vm342 = vcmp.lt.s32.totalorder %v340, 0
    %v343 = vsub.s32 0, %v340
    %v344 = vsel %vm342, %v343, %v340
    %vm345 = vcmp.lt.s32.totalorder %v341, 0
    %v346 = vsub.s32 0, %v341
    %v347 = vsel %vm345, %v346, %v341
    %vm348 = vcmp.eq.s32.totalorder %v344, 2
    %vm349 = vcmp.eq.s32.totalorder %v347, 2
    %vm350 = vmand %vm332, %vm348
    %vm351 = vmand %vm333, %vm349
    %v352 = vsel %vm350, 1.0, 0.0
    %v353 = vsel %vm351, 1.0, 0.0
    %v356 = vcombine.low %v352, %v353
    %v358 = vunpack.c.l.s4 1966171168
    %v359 = vunpack.c.0.s8 %v358
    %v360 = vlaneseq
    %v361 = vshrl.u32 %v360, 7
    %v362 = vsub.s32 %v359, %v361
    %v363 = vrot.slane %v356, %v362
    %v365 = vunpack.c.l.s4 1966171168
    %v366 = vunpack.c.0.s8 %v365
    %v367 = vlaneseq
    %v368 = vshrl.u32 %v367, 7
    %v369 = vsub.s32 %v366, %v368
    %v370 = vrot.slane %v363, %v369
    %s372 = scalar_lea.vmem [#allocation5], 7
    %373 = vst.msk [vmem:[%s372] ss:$8 sm:$0x3] %vm68, %v370
    %374 = vst.msk [vmem:[%s372] ss:$8 sm:$0x0] %vm68, %v370
    // Predicated region
    $region14: #{tpu_custom_call.1} parent=1 // pred_check
      _
    $region15: #{tpu_custom_call.1} parent=1 // pred_check_branch
      %376 = sbr.rel (0) target = $region17
    $region16: #{tpu_custom_call.1} parent=1 // pred_region
      %s378 = ssub.s32 256, 256
      %379 = vsyncadd [#allocation4], %s378
      %s381 = sshll.u32 [#allocation5], 4
      %s382 = int_to_ptr.vmem [resolvable:$true] %s381
      %384 = dma.vmem_to_hbm [thread:$0]  %s382, 256, %s2, [#allocation4]
    $region17: #{tpu_custom_call.1} parent=1 // pred_fallthru
      _
    // Predicated region
    $region18: #{tpu_custom_call.1} parent=1 // pred_check
      _
    $region19: #{tpu_custom_call.1} parent=1 // pred_check_branch
      %386 = sbr.rel (0) target = $region21
    $region20: #{tpu_custom_call.1} parent=1 // pred_region
      %387 = dma.done [#allocation4], 256
    $region21: #{tpu_custom_call.1} parent=1 // pred_fallthru
      _
    %388 = vsyncpa [#allocation3], 1
    %389 = vsyncpa [#allocation4], 1

</llo_original>
